<compile_context>
chip_gen: v7x
topology: tpu7x:2x2x1
jax: 0.10.0
libtpu: 0.0.40
codegen_flags: <defaults>
</compile_context>

<pallas_src>
import jax
import jax.numpy as jnp
import numpy as np
from jax.experimental import pallas as pl
from jax.experimental.pallas import tpu as pltpu

LAYER_SIZES = (32, 48, 24, 16, 8)  # fc1..fc5 output sizes from the spec.


def _mlp_kernel(x_ref, w1, b1, w2, b2, w3, b3, w4, b4, w5, b5, out_ref):
  """One batch tile: x (TB, D) bf16 -> out (TB, 8) f32. Weights are (in, out)."""
  h = jnp.dot(x_ref[...], w1[...], preferred_element_type=jnp.float32) + b1[...]
  h = jnp.maximum(h, 0.0)
  h = jnp.dot(h, w2[...], preferred_element_type=jnp.float32) + b2[...]
  h = jnp.maximum(h, 0.0)
  h = jnp.dot(h, w3[...], preferred_element_type=jnp.float32) + b3[...]
  h = jnp.maximum(h, 0.0)
  h = jnp.dot(h, w4[...], preferred_element_type=jnp.float32) + b4[...]
  h = jnp.maximum(h, 0.0)
  out_ref[...] = (jnp.dot(h, w5[...], preferred_element_type=jnp.float32)
                  + b5[...]).astype(out_ref.dtype)


def network_forward(x, params, *, batch_tile=1024):
  """x: (B, input_size) f32; params: [(W_in_out, b_1_out) x 5] -> (B, 8) f32."""
  B, D = x.shape
  # HBM-resident operands as bf16 (halves the dominant HBM stream); biases f32.
  ws = [w.astype(jnp.bfloat16) for (w, _) in params]
  bs = [b.astype(jnp.float32) for (_, b) in params]
  out_dim = ws[-1].shape[1]

  # Batch tile: multiple of 8 (sublane), capped at what's actually needed.
  TB = max(8, (int(batch_tile) // 8) * 8)
  TB = min(TB, ((B + 7) // 8) * 8)
  if pl.cdiv(B, TB) == 1 and B > 8:
    # v7x has 2 TensorCores: make sure the "parallel" batch axis has >= 2 steps.
    TB = max(8, (((B + 1) // 2 + 7) // 8) * 8)
  grid = (pl.cdiv(B, TB),)

  x_bf16 = x.astype(jnp.bfloat16)

  in_specs = [pl.BlockSpec((TB, D), lambda i: (i, 0))]
  flat_args = [x_bf16]
  for w, b in zip(ws, bs):
    # Weights/biases: full-array blocks, resident across all grid steps.
    in_specs.append(pl.BlockSpec(w.shape, lambda i: (0, 0)))
    flat_args.append(w)
    in_specs.append(pl.BlockSpec(b.shape, lambda i: (0, 0)))
    flat_args.append(b)

  flops = 2 * B * sum(int(w.shape[0]) * int(w.shape[1]) for w in ws)
  bytes_accessed = (
      B * D * x_bf16.dtype.itemsize
      + B * out_dim * 4
      + sum(int(np.prod(w.shape)) * w.dtype.itemsize for w in ws)
      + sum(int(np.prod(b.shape)) * b.dtype.itemsize for b in bs))
  cost = pl.CostEstimate(flops=int(flops), transcendentals=0,
                         bytes_accessed=int(bytes_accessed))

  out = pl.pallas_call(
      _mlp_kernel,
      out_shape=jax.ShapeDtypeStruct((B, out_dim), jnp.float32),
      grid=grid,
      in_specs=in_specs,
      out_specs=pl.BlockSpec((TB, out_dim), lambda i: (i, 0)),
      compiler_params=pltpu.CompilerParams(
          dimension_semantics=("parallel",)),
      cost_estimate=cost,
  )(*flat_args)
  return out


def reference_forward(x, params):
  """Pure-JAX f32 reference matching the PyTorch forward."""
  h = x
  for i, (w, b) in enumerate(params):
    h = h @ w + b
    if i < len(params) - 1:
      h = jnp.maximum(h, 0.0)
  return h


def init_params(key, input_size):
  """PyTorch-default-style (uniform fan-in) init; weights stored as (in, out)."""
  params = []
  in_d = input_size
  ks = jax.random.split(key, 2 * len(LAYER_SIZES))
  for li, out_d in enumerate(LAYER_SIZES):
    bound = 1.0 / np.sqrt(in_d)
    W = jax.random.uniform(ks[2 * li], (in_d, out_d), jnp.float32, -bound, bound)
    b = jax.random.uniform(ks[2 * li + 1], (1, out_d), jnp.float32, -bound, bound)
    params.append((W, b))
    in_d = out_d
  return params


if __name__ == "__main__":
  B = 2
  INPUT_SIZE = 64

  key = jax.random.PRNGKey(0)
  k_p, k_x = jax.random.split(key)
  params = init_params(k_p, INPUT_SIZE)
  x = jax.random.normal(k_x, (B, INPUT_SIZE), jnp.float32)

  out = jax.block_until_ready(network_forward(x, params))
  ref = jax.block_until_ready(reference_forward(x, params))

  # bf16 input stream + default MXU precision -> small drift vs f32 reference.
  np.testing.assert_allclose(np.asarray(out), np.asarray(ref),
                             rtol=2e-2, atol=2e-2)
  assert out.shape == (B, 8)
  print("KERNEL_OK")
</pallas_src>

<mosaic_0001>
module attributes {stable_mosaic.version = 11 : i64} {
  func.func @_mlp_kernel(%arg0: i32, %arg1: memref<8x64xbf16, #tpu.memory_space<vmem>>, %arg2: memref<64x32xbf16, #tpu.memory_space<vmem>>, %arg3: memref<1x32xf32, #tpu.memory_space<vmem>>, %arg4: memref<32x48xbf16, #tpu.memory_space<vmem>>, %arg5: memref<1x48xf32, #tpu.memory_space<vmem>>, %arg6: memref<48x24xbf16, #tpu.memory_space<vmem>>, %arg7: memref<1x24xf32, #tpu.memory_space<vmem>>, %arg8: memref<24x16xbf16, #tpu.memory_space<vmem>>, %arg9: memref<1x16xf32, #tpu.memory_space<vmem>>, %arg10: memref<16x8xbf16, #tpu.memory_space<vmem>>, %arg11: memref<1x8xf32, #tpu.memory_space<vmem>>, %arg12: memref<8x8xf32, #tpu.memory_space<vmem>>) attributes {dimension_semantics = [#tpu.dimension_semantics<parallel>], iteration_bounds = array<i64: 1>, scalar_prefetch = 0 : i64, scratch_operands = 0 : i64, tpu.core_type = #tpu.core_type<tc>, window_params = [{transform_indices = @transform_0, window_bounds = array<i64: 8, 64>}, {pipeline_mode = #tpu.pipeline_mode<synchronous>, transform_indices = @transform_1, window_bounds = array<i64: 64, 32>}, {pipeline_mode = #tpu.pipeline_mode<synchronous>, transform_indices = @transform_2, window_bounds = array<i64: 1, 32>}, {pipeline_mode = #tpu.pipeline_mode<synchronous>, transform_indices = @transform_3, window_bounds = array<i64: 32, 48>}, {pipeline_mode = #tpu.pipeline_mode<synchronous>, transform_indices = @transform_4, window_bounds = array<i64: 1, 48>}, {pipeline_mode = #tpu.pipeline_mode<synchronous>, transform_indices = @transform_5, window_bounds = array<i64: 48, 24>}, {pipeline_mode = #tpu.pipeline_mode<synchronous>, transform_indices = @transform_6, window_bounds = array<i64: 1, 24>}, {pipeline_mode = #tpu.pipeline_mode<synchronous>, transform_indices = @transform_7, window_bounds = array<i64: 24, 16>}, {pipeline_mode = #tpu.pipeline_mode<synchronous>, transform_indices = @transform_8, window_bounds = array<i64: 1, 16>}, {pipeline_mode = #tpu.pipeline_mode<synchronous>, transform_indices = @transform_9, window_bounds = array<i64: 16, 8>}, {pipeline_mode = #tpu.pipeline_mode<synchronous>, transform_indices = @transform_10, window_bounds = array<i64: 1, 8>}, {transform_indices = @transform_11, window_bounds = array<i64: 8, 8>}]} {
    %c0 = arith.constant 0 : index
    %c0_0 = arith.constant 0 : index
    %0 = vector.load %arg1[%c0, %c0_0] : memref<8x64xbf16, #tpu.memory_space<vmem>>, vector<8x64xbf16>
    %c0_1 = arith.constant 0 : index
    %c0_2 = arith.constant 0 : index
    %1 = vector.load %arg2[%c0_1, %c0_2] : memref<64x32xbf16, #tpu.memory_space<vmem>>, vector<64x32xbf16>
    %cst = arith.constant dense<0.000000e+00> : vector<8x32xf32>
    %2 = tpu.matmul %0, %1, %cst {dimension_numbers = #tpu.dot_dimension_numbers<[1], [0], [0], [1], [0, 0, 1, 1], [], []>} : vector<8x64xbf16>, vector<64x32xbf16>, vector<8x32xf32> -> vector<8x32xf32>
    %c0_3 = arith.constant 0 : index
    %c0_4 = arith.constant 0 : index
    %3 = vector.load %arg3[%c0_3, %c0_4] : memref<1x32xf32, #tpu.memory_space<vmem>>, vector<1x32xf32>
    %4 = vector.broadcast %3 : vector<1x32xf32> to vector<8x32xf32>
    %5 = arith.addf %2, %4 : vector<8x32xf32>
    %cst_5 = arith.constant 0.000000e+00 : f32
    %6 = vector.broadcast %cst_5 : f32 to vector<8x32xf32>
    %7 = arith.maximumf %5, %6 : vector<8x32xf32>
    %c0_6 = arith.constant 0 : index
    %c0_7 = arith.constant 0 : index
    %8 = vector.load %arg4[%c0_6, %c0_7] : memref<32x48xbf16, #tpu.memory_space<vmem>>, vector<32x48xbf16>
    %cst_8 = arith.constant dense<0.000000e+00> : vector<8x48xf32>
    %9 = tpu.matmul %7, %8, %cst_8 {dimension_numbers = #tpu.dot_dimension_numbers<[1], [0], [0], [1], [0, 0, 1, 1], [], []>} : vector<8x32xf32>, vector<32x48xbf16>, vector<8x48xf32> -> vector<8x48xf32>
    %c0_9 = arith.constant 0 : index
    %c0_10 = arith.constant 0 : index
    %10 = vector.load %arg5[%c0_9, %c0_10] : memref<1x48xf32, #tpu.memory_space<vmem>>, vector<1x48xf32>
    %11 = vector.broadcast %10 : vector<1x48xf32> to vector<8x48xf32>
    %12 = arith.addf %9, %11 : vector<8x48xf32>
    %cst_11 = arith.constant 0.000000e+00 : f32
    %13 = vector.broadcast %cst_11 : f32 to vector<8x48xf32>
    %14 = arith.maximumf %12, %13 : vector<8x48xf32>
    %c0_12 = arith.constant 0 : index
    %c0_13 = arith.constant 0 : index
    %15 = vector.load %arg6[%c0_12, %c0_13] : memref<48x24xbf16, #tpu.memory_space<vmem>>, vector<48x24xbf16>
    %cst_14 = arith.constant dense<0.000000e+00> : vector<8x24xf32>
    %16 = tpu.matmul %14, %15, %cst_14 {dimension_numbers = #tpu.dot_dimension_numbers<[1], [0], [0], [1], [0, 0, 1, 1], [], []>} : vector<8x48xf32>, vector<48x24xbf16>, vector<8x24xf32> -> vector<8x24xf32>
    %c0_15 = arith.constant 0 : index
    %c0_16 = arith.constant 0 : index
    %17 = vector.load %arg7[%c0_15, %c0_16] : memref<1x24xf32, #tpu.memory_space<vmem>>, vector<1x24xf32>
    %18 = vector.broadcast %17 : vector<1x24xf32> to vector<8x24xf32>
    %19 = arith.addf %16, %18 : vector<8x24xf32>
    %cst_17 = arith.constant 0.000000e+00 : f32
    %20 = vector.broadcast %cst_17 : f32 to vector<8x24xf32>
    %21 = arith.maximumf %19, %20 : vector<8x24xf32>
    %c0_18 = arith.constant 0 : index
    %c0_19 = arith.constant 0 : index
    %22 = vector.load %arg8[%c0_18, %c0_19] : memref<24x16xbf16, #tpu.memory_space<vmem>>, vector<24x16xbf16>
    %cst_20 = arith.constant dense<0.000000e+00> : vector<8x16xf32>
    %23 = tpu.matmul %21, %22, %cst_20 {dimension_numbers = #tpu.dot_dimension_numbers<[1], [0], [0], [1], [0, 0, 1, 1], [], []>} : vector<8x24xf32>, vector<24x16xbf16>, vector<8x16xf32> -> vector<8x16xf32>
    %c0_21 = arith.constant 0 : index
    %c0_22 = arith.constant 0 : index
    %24 = vector.load %arg9[%c0_21, %c0_22] : memref<1x16xf32, #tpu.memory_space<vmem>>, vector<1x16xf32>
    %25 = vector.broadcast %24 : vector<1x16xf32> to vector<8x16xf32>
    %26 = arith.addf %23, %25 : vector<8x16xf32>
    %cst_23 = arith.constant 0.000000e+00 : f32
    %27 = vector.broadcast %cst_23 : f32 to vector<8x16xf32>
    %28 = arith.maximumf %26, %27 : vector<8x16xf32>
    %c0_24 = arith.constant 0 : index
    %c0_25 = arith.constant 0 : index
    %29 = vector.load %arg10[%c0_24, %c0_25] : memref<16x8xbf16, #tpu.memory_space<vmem>>, vector<16x8xbf16>
    %cst_26 = arith.constant dense<0.000000e+00> : vector<8x8xf32>
    %30 = tpu.matmul %28, %29, %cst_26 {dimension_numbers = #tpu.dot_dimension_numbers<[1], [0], [0], [1], [0, 0, 1, 1], [], []>} : vector<8x16xf32>, vector<16x8xbf16>, vector<8x8xf32> -> vector<8x8xf32>
    %c0_27 = arith.constant 0 : index
    %c0_28 = arith.constant 0 : index
    %31 = vector.load %arg11[%c0_27, %c0_28] : memref<1x8xf32, #tpu.memory_space<vmem>>, vector<1x8xf32>
    %32 = vector.broadcast %31 : vector<1x8xf32> to vector<8x8xf32>
    %33 = arith.addf %30, %32 : vector<8x8xf32>
    %c0_29 = arith.constant 0 : index
    %c0_30 = arith.constant 0 : index
    %34 = vector.load %arg12[%c0_29, %c0_30] : memref<8x8xf32, #tpu.memory_space<vmem>>, vector<8x8xf32>
    tpu.vector_store %arg12[%c0_29, %c0_30], %33 {strides = array<i32>} : memref<8x8xf32, #tpu.memory_space<vmem>>, vector<8x8xf32>,
    return
  }
  func.func @transform_0(%arg0: i32) -> (i32, i32) {
    %c0_i32 = arith.constant 0 : i32
    %c0_i32_0 = arith.constant 0 : i32
    return %arg0, %c0_i32 : i32, i32
  }
  func.func @transform_1(%arg0: i32) -> (i32, i32) {
    %c0_i32 = arith.constant 0 : i32
    %c0_i32_0 = arith.constant 0 : i32
    %c0_i32_1 = arith.constant 0 : i32
    return %c0_i32, %c0_i32_0 : i32, i32
  }
  func.func @transform_2(%arg0: i32) -> (i32, i32) {
    %c0_i32 = arith.constant 0 : i32
    %c0_i32_0 = arith.constant 0 : i32
    %c0_i32_1 = arith.constant 0 : i32
    return %c0_i32, %c0_i32_0 : i32, i32
  }
  func.func @transform_3(%arg0: i32) -> (i32, i32) {
    %c0_i32 = arith.constant 0 : i32
    %c0_i32_0 = arith.constant 0 : i32
    %c0_i32_1 = arith.constant 0 : i32
    return %c0_i32, %c0_i32_0 : i32, i32
  }
  func.func @transform_4(%arg0: i32) -> (i32, i32) {
    %c0_i32 = arith.constant 0 : i32
    %c0_i32_0 = arith.constant 0 : i32
    %c0_i32_1 = arith.constant 0 : i32
    return %c0_i32, %c0_i32_0 : i32, i32
  }
  func.func @transform_5(%arg0: i32) -> (i32, i32) {
    %c0_i32 = arith.constant 0 : i32
    %c0_i32_0 = arith.constant 0 : i32
    %c0_i32_1 = arith.constant 0 : i32
    return %c0_i32, %c0_i32_0 : i32, i32
  }
  func.func @transform_6(%arg0: i32) -> (i32, i32) {
    %c0_i32 = arith.constant 0 : i32
    %c0_i32_0 = arith.constant 0 : i32
    %c0_i32_1 = arith.constant 0 : i32
    return %c0_i32, %c0_i32_0 : i32, i32
  }
  func.func @transform_7(%arg0: i32) -> (i32, i32) {
    %c0_i32 = arith.constant 0 : i32
    %c0_i32_0 = arith.constant 0 : i32
    %c0_i32_1 = arith.constant 0 : i32
    return %c0_i32, %c0_i32_0 : i32, i32
  }
  func.func @transform_8(%arg0: i32) -> (i32, i32) {
    %c0_i32 = arith.constant 0 : i32
    %c0_i32_0 = arith.constant 0 : i32
    %c0_i32_1 = arith.constant 0 : i32
    return %c0_i32, %c0_i32_0 : i32, i32
  }
  func.func @transform_9(%arg0: i32) -> (i32, i32) {
    %c0_i32 = arith.constant 0 : i32
    %c0_i32_0 = arith.constant 0 : i32
    %c0_i32_1 = arith.constant 0 : i32
    return %c0_i32, %c0_i32_0 : i32, i32
  }
  func.func @transform_10(%arg0: i32) -> (i32, i32) {
    %c0_i32 = arith.constant 0 : i32
    %c0_i32_0 = arith.constant 0 : i32
    %c0_i32_1 = arith.constant 0 : i32
    return %c0_i32, %c0_i32_0 : i32, i32
  }
  func.func @transform_11(%arg0: i32) -> (i32, i32) {
    %c0_i32 = arith.constant 0 : i32
    %c0_i32_0 = arith.constant 0 : i32
    return %arg0, %c0_i32 : i32, i32
  }
}

</mosaic_0001>

<llo_original>
// kernel: tpu_custom_call.1
$region0: #{tpu_custom_call.1}
  #allocation0 [shape = 'u32[]', space=smem, size = 0x4, offset = 0x4, fixed_abs, tag = 'smem constant byte address 0x4 - core index']
  #allocation1 [shape = 'u32[144,128]{1,0:T(1,128)}', space=vmem, size = 0x12000, scoped, tag = 'internal scratch']
  %s0 = inlined_call_operand.vmem [shape: bf16[2,64], index: 0, kind: input, shape index: {}]
  %s1 = inlined_call_operand.vmem [shape: bf16[64,32], index: 1, kind: input, shape index: {}]
  %s2 = inlined_call_operand.vmem [shape: f32[1,32], index: 2, kind: input, shape index: {}]
  %s3 = inlined_call_operand.vmem [shape: bf16[32,48], index: 3, kind: input, shape index: {}]
  %s4 = inlined_call_operand.vmem [shape: f32[1,48], index: 4, kind: input, shape index: {}]
  %s5 = inlined_call_operand.vmem [shape: bf16[48,24], index: 5, kind: input, shape index: {}]
  %s6 = inlined_call_operand.vmem [shape: f32[1,24], index: 6, kind: input, shape index: {}]
  %s7 = inlined_call_operand.vmem [shape: bf16[24,16], index: 7, kind: input, shape index: {}]
  %s8 = inlined_call_operand.vmem [shape: f32[1,16], index: 8, kind: input, shape index: {}]
  %s9 = inlined_call_operand.vmem [shape: bf16[16,8], index: 9, kind: input, shape index: {}]
  %s10 = inlined_call_operand.vmem [shape: f32[1,8], index: 10, kind: input, shape index: {}]
  %s11 = inlined_call_operand.hbm [shape: f32[2,8], index: 11, kind: output, shape index: {}]
  %s12 = sld [smem:[#allocation0]]
  $region54: #{tpu_custom_call.1} parent=0
    _
  %s14 = ssub.s32 1, %s12
  %s15 = scalar_select 0, %s14, %s12
  $region1: #{tpu_custom_call.1} parent=0
    #allocation2 [shape = 'u8[4096]{0}', space=vmem, size = 0x1000, scoped, tag = 'output window, operand 0, single buffered']
    #allocation3 [shape = 's32[1]{0}', space=sflag, size = 0x4, scoped, tag = 'scoped memory for tpu_custom_call.1']
    %16 = vsyncpa [#allocation3], 0
    // Predicated region
    $region2: #{tpu_custom_call.1} parent=1 // pred_check
      _
    $region3: #{tpu_custom_call.1} parent=1 // pred_check_branch
      %18 = sbr.rel (0) target = $region5
    $region4: #{tpu_custom_call.1} parent=1 // pred_region
      _
    $region5: #{tpu_custom_call.1} parent=1 // pred_fallthru
      _
    // Predicated region
    $region6: #{tpu_custom_call.1} parent=1 // pred_check
      _
    $region7: #{tpu_custom_call.1} parent=1 // pred_check_branch
      %20 = sbr.rel (0) target = $region9
    $region8: #{tpu_custom_call.1} parent=1 // pred_region
      _
    $region9: #{tpu_custom_call.1} parent=1 // pred_fallthru
      _
    // Predicated region
    $region10: #{tpu_custom_call.1} parent=1 // pred_check
      _
    $region11: #{tpu_custom_call.1} parent=1 // pred_check_branch
      %22 = sbr.rel (0) target = $region13
    $region12: #{tpu_custom_call.1} parent=1 // pred_region
      _
    $region13: #{tpu_custom_call.1} parent=1 // pred_fallthru
      _
    // Predicated region
    $region14: #{tpu_custom_call.1} parent=1 // pred_check
      _
    $region15: #{tpu_custom_call.1} parent=1 // pred_check_branch
      %24 = sbr.rel (0) target = $region17
    $region16: #{tpu_custom_call.1} parent=1 // pred_region
      _
    $region17: #{tpu_custom_call.1} parent=1 // pred_fallthru
      _
    // Predicated region
    $region18: #{tpu_custom_call.1} parent=1 // pred_check
      _
    $region19: #{tpu_custom_call.1} parent=1 // pred_check_branch
      %26 = sbr.rel (0) target = $region21
    $region20: #{tpu_custom_call.1} parent=1 // pred_region
      _
    $region21: #{tpu_custom_call.1} parent=1 // pred_fallthru
      _
    // Predicated region
    $region22: #{tpu_custom_call.1} parent=1 // pred_check
      _
    $region23: #{tpu_custom_call.1} parent=1 // pred_check_branch
      %28 = sbr.rel (0) target = $region25
    $region24: #{tpu_custom_call.1} parent=1 // pred_region
      _
    $region25: #{tpu_custom_call.1} parent=1 // pred_fallthru
      _
    // Predicated region
    $region26: #{tpu_custom_call.1} parent=1 // pred_check
      _
    $region27: #{tpu_custom_call.1} parent=1 // pred_check_branch
      %30 = sbr.rel (0) target = $region29
    $region28: #{tpu_custom_call.1} parent=1 // pred_region
      _
    $region29: #{tpu_custom_call.1} parent=1 // pred_fallthru
      _
    // Predicated region
    $region30: #{tpu_custom_call.1} parent=1 // pred_check
      _
    $region31: #{tpu_custom_call.1} parent=1 // pred_check_branch
      %32 = sbr.rel (0) target = $region33
    $region32: #{tpu_custom_call.1} parent=1 // pred_region
      _
    $region33: #{tpu_custom_call.1} parent=1 // pred_fallthru
      _
    // Predicated region
    $region34: #{tpu_custom_call.1} parent=1 // pred_check
      _
    $region35: #{tpu_custom_call.1} parent=1 // pred_check_branch
      %34 = sbr.rel (0) target = $region37
    $region36: #{tpu_custom_call.1} parent=1 // pred_region
      _
    $region37: #{tpu_custom_call.1} parent=1 // pred_fallthru
      _
    // Predicated region
    $region38: #{tpu_custom_call.1} parent=1 // pred_check
      _
    $region39: #{tpu_custom_call.1} parent=1 // pred_check_branch
      %36 = sbr.rel (0) target = $region41
    $region40: #{tpu_custom_call.1} parent=1 // pred_region
      _
    $region41: #{tpu_custom_call.1} parent=1 // pred_fallthru
      _
    // Predicated region
    $region42: #{tpu_custom_call.1} parent=1 // pred_check
      _
    $region43: #{tpu_custom_call.1} parent=1 // pred_check_branch
      %38 = sbr.rel (0) target = $region45
    $region44: #{tpu_custom_call.1} parent=1 // pred_region
      _
    $region45: #{tpu_custom_call.1} parent=1 // pred_fallthru
      _
    %v40 = vld [vmem:[%s0] sm:$0x1]
    %v41 = vld [vmem:[%s0 + $0x1] sm:$0x1]
    %v42 = vld [vmem:[%s0 + $0x2] sm:$0x1]
    %v43 = vld [vmem:[%s0 + $0x3] sm:$0x1]
    %v44 = vld [vmem:[%s1] sm:$0xf]
    %v45 = vld [vmem:[%s1 + $0x4] sm:$0xf]
    %v46 = vld [vmem:[%s1 + $0x8] sm:$0xf]
    %v47 = vld [vmem:[%s1 + $0xc] sm:$0xf]
    %v48 = vld [vmem:[%s1 + $0x10] sm:$0xf]
    %v49 = vld [vmem:[%s1 + $0x14] sm:$0xf]
    %v50 = vld [vmem:[%s1 + $0x18] sm:$0xf]
    %v51 = vld [vmem:[%s1 + $0x1c] sm:$0xf]
    %v52 = vld [vmem:[%s2] sm:$0x1]
    %v54 = vlaneseq
    %v55 = vshrl.u32 %v54, 7
    %v56 = vsub.s32 0, %v55
    %v57 = vrot.slane %v52, %v56
    %v63 = vcombine.low %v40, %v41
    %v64 = vcombine.low %v42, %v43
    %v66 = vunpack.c.l.s4 1966171168
    %v67 = vunpack.c.0.s8 %v66
    %v68 = vlaneseq
    %v69 = vshrl.u32 %v68, 7
    %v70 = vsub.s32 %v67, %v69
    %v71 = vrot.slane %v63, %v70
    %v73 = vunpack.c.l.s4 1966171168
    %v74 = vunpack.c.0.s8 %v73
    %v75 = vlaneseq
    %v76 = vshrl.u32 %v75, 7
    %v77 = vsub.s32 %v74, %v76
    %v78 = vrot.slane %v64, %v77
    %v79 = vcombine.low %v71, %v78
    %v81 = vunpack.c.l.s4 1966171168
    %v82 = vunpack.c.0.s8 %v81
    %v83 = vlaneseq
    %v84 = vshrl.u32 %v83, 7
    %v85 = vsub.s32 %v82, %v84
    %v86 = vrot.slane %v79, %v85
    %v95 = vunpack.c.l.b16 %v44
    %v96 = vunpack.c.l.b16 %v45
    %v97 = vunpack.c.l.b16 %v46
    %v98 = vunpack.c.l.b16 %v47
    %v99 = vunpack.c.l.b16 %v48
    %v100 = vunpack.c.l.b16 %v49
    %v101 = vunpack.c.l.b16 %v50
    %v102 = vunpack.c.l.b16 %v51
    %v103 = vpack.c.b16 %v96, %v95
    %v104 = vpack.c.b16 %v98, %v97
    %v105 = vpack.c.b16 %v100, %v99
    %v106 = vpack.c.b16 %v102, %v101
    %vm111 = vcmask 523264
    %v113 = vsel %vm111, %v86, 0
    %115 = vmatprep.subr.bf16.mxu0 0
    %116 = vmatpush1.bf16.msra.mxu0 %v103
    %117 = vmatprep.subr.bf16.mxu0 0
    %118 = vmatpush1.bf16.msra.mxu0 %v104
    %119 = vmatprep.subr.bf16.mxu0 0
    %120 = vmatpush1.bf16.msra.mxu0 %v105
    %121 = vmatprep.subr.bf16.mxu0 0
    %122 = vmatpush1.bf16.msra.mxu0 %v106
    %123 = vmatprep.subr.bf16.mxu0 0
    %124 = vmatpush1.bf16.msra.mxu0 0
    %125 = vmatprep.subr.bf16.mxu0 0
    %126 = vmatpush1.bf16.msra.mxu0 0
    %127 = vmatprep.subr.bf16.mxu0 0
    %128 = vmatpush1.bf16.msra.mxu0 0
    %129 = vmatprep.subr.bf16.mxu0 0
    %130 = vmatpush1.bf16.msra.mxu0 0
    %131 = vmatprep.subr.bf16.mxu0 0
    %132 = vmatpush1.bf16.msra.mxu0 0
    %133 = vmatprep.subr.bf16.mxu0 0
    %134 = vmatpush1.bf16.msra.mxu0 0
    %135 = vmatprep.subr.bf16.mxu0 0
    %136 = vmatpush1.bf16.msra.mxu0 0
    %137 = vmatprep.subr.bf16.mxu0 0
    %138 = vmatpush1.bf16.msra.mxu0 0
    %139 = vmatprep.subr.bf16.mxu0 0
    %140 = vmatpush1.bf16.msra.mxu0 0
    %141 = vmatprep.subr.bf16.mxu0 0
    %142 = vmatpush1.bf16.msra.mxu0 0
    %143 = vmatprep.subr.bf16.mxu0 0
    %144 = vmatpush1.bf16.msra.mxu0 0
    %145 = vmatprep.subr.bf16.mxu0 0
    %146 = vmatpush1.bf16.msra.mxu0 0
    %147 = vmatprep.mubr.bf16.mxu0 0
    %148 = vmatmul.mubr.bf16.gmra.mrb[0].mxu0 %v113
    %v149 = vpop.f32.mrb[0].mxu0
    %v150 = vadd.f32 %v57, %v149
    %v151 = vpop.f32.mrb[0].mxu0
    %v152 = vpop.f32.mrb[0].mxu0
    %v153 = vpop.f32.mrb[0].mxu0
    %154 = vdwg.mxu0
    %v155 = vmax.f32 %v150, 0.0
    %v156 = vld [vmem:[%s3] sm:$0xf]
    %v157 = vld [vmem:[%s3 + $0x4] sm:$0xf]
    %v158 = vld [vmem:[%s3 + $0x8] sm:$0xf]
    %v159 = vld [vmem:[%s3 + $0xc] sm:$0xf]
    %v160 = vld [vmem:[%s4] sm:$0x1]
    %v162 = vlaneseq
    %v163 = vshrl.u32 %v162, 7
    %v164 = vsub.s32 0, %v163
    %v165 = vrot.slane %v160, %v164
    %v171 = vunpack.c.l.b16 %v156
    %v172 = vunpack.c.l.b16 %v157
    %v173 = vunpack.c.l.b16 %v158
    %v174 = vunpack.c.l.b16 %v159
    %v175 = vpack.c.b16 %v172, %v171
    %v176 = vpack.c.b16 %v174, %v173
    %vm179 = vcmask 261120
    %v181 = vsel %vm179, %v155, 0
    %183 = vmatprep.subr.bf16.mxu0 0
    %184 = vmatpush1.bf16.msra.mxu0 %v175
    %185 = vmatprep.subr.bf16.mxu0 0
    %186 = vmatpush1.bf16.msra.mxu0 %v176
    %187 = vmatprep.subr.bf16.mxu0 0
    %188 = vmatpush1.bf16.msra.mxu0 0
    %189 = vmatprep.subr.bf16.mxu0 0
    %190 = vmatpush1.bf16.msra.mxu0 0
    %191 = vmatprep.subr.bf16.mxu0 0
    %192 = vmatpush1.bf16.msra.mxu0 0
    %193 = vmatprep.subr.bf16.mxu0 0
    %194 = vmatpush1.bf16.msra.mxu0 0
    %195 = vmatprep.subr.bf16.mxu0 0
    %196 = vmatpush1.bf16.msra.mxu0 0
    %197 = vmatprep.subr.bf16.mxu0 0
    %198 = vmatpush1.bf16.msra.mxu0 0
    %199 = vmatprep.subr.bf16.mxu0 0
    %200 = vmatpush1.bf16.msra.mxu0 0
    %201 = vmatprep.subr.bf16.mxu0 0
    %202 = vmatpush1.bf16.msra.mxu0 0
    %203 = vmatprep.subr.bf16.mxu0 0
    %204 = vmatpush1.bf16.msra.mxu0 0
    %205 = vmatprep.subr.bf16.mxu0 0
    %206 = vmatpush1.bf16.msra.mxu0 0
    %207 = vmatprep.subr.bf16.mxu0 0
    %208 = vmatpush1.bf16.msra.mxu0 0
    %209 = vmatprep.subr.bf16.mxu0 0
    %210 = vmatpush1.bf16.msra.mxu0 0
    %211 = vmatprep.subr.bf16.mxu0 0
    %212 = vmatpush1.bf16.msra.mxu0 0
    %213 = vmatprep.subr.bf16.mxu0 0
    %214 = vmatpush1.bf16.msra.mxu0 0
    %215 = vmatprep.mubr.f32.mxu0 0.0
    %216 = vmatmul.mubr.f32.gmra.mrb[0].mxu0 %v181
    %v217 = vpop.f32.mrb[0].mxu0
    %v218 = vadd.f32 %v165, %v217
    %v219 = vpop.f32.mrb[0].mxu0
    %220 = vdwg.mxu0
    %v221 = vmax.f32 %v218, 0.0
    %v222 = vld [vmem:[%s5] sm:$0xf]
    %v223 = vld [vmem:[%s5 + $0x4] sm:$0xf]
    %v224 = vld [vmem:[%s5 + $0x8] sm:$0xf]
    %v225 = vld [vmem:[%s5 + $0xc] sm:$0xf]
    %v226 = vld [vmem:[%s5 + $0x10] sm:$0xf]
    %v227 = vld [vmem:[%s5 + $0x14] sm:$0xf]
    %v228 = vld [vmem:[%s6] sm:$0x1]
    %v230 = vlaneseq
    %v231 = vshrl.u32 %v230, 7
    %v232 = vsub.s32 0, %v231
    %v233 = vrot.slane %v228, %v232
    %v241 = vunpack.c.l.b16 %v222
    %v242 = vunpack.c.l.b16 %v223
    %v243 = vunpack.c.l.b16 %v224
    %v244 = vunpack.c.l.b16 %v225
    %v245 = vunpack.c.l.b16 %v226
    %v246 = vunpack.c.l.b16 %v227
    %v247 = vpack.c.b16 %v242, %v241
    %v248 = vpack.c.b16 %v244, %v243
    %v249 = vpack.c.b16 %v246, %v245
    %vm253 = vcmask 392192
    %v255 = vsel %vm253, %v221, 0
    %257 = vmatprep.subr.bf16.mxu0 0
    %258 = vmatpush1.bf16.msra.mxu0 %v247
    %259 = vmatprep.subr.bf16.mxu0 0
    %260 = vmatpush1.bf16.msra.mxu0 %v248
    %261 = vmatprep.subr.bf16.mxu0 0
    %262 = vmatpush1.bf16.msra.mxu0 %v249
    %263 = vmatprep.subr.bf16.mxu0 0
    %264 = vmatpush1.bf16.msra.mxu0 0
    %265 = vmatprep.subr.bf16.mxu0 0
    %266 = vmatpush1.bf16.msra.mxu0 0
    %267 = vmatprep.subr.bf16.mxu0 0
    %268 = vmatpush1.bf16.msra.mxu0 0
    %269 = vmatprep.subr.bf16.mxu0 0
    %270 = vmatpush1.bf16.msra.mxu0 0
    %271 = vmatprep.subr.bf16.mxu0 0
    %272 = vmatpush1.bf16.msra.mxu0 0
    %273 = vmatprep.subr.bf16.mxu0 0
    %274 = vmatpush1.bf16.msra.mxu0 0
    %275 = vmatprep.subr.bf16.mxu0 0
    %276 = vmatpush1.bf16.msra.mxu0 0
    %277 = vmatprep.subr.bf16.mxu0 0
    %278 = vmatpush1.bf16.msra.mxu0 0
    %279 = vmatprep.subr.bf16.mxu0 0
    %280 = vmatpush1.bf16.msra.mxu0 0
    %281 = vmatprep.subr.bf16.mxu0 0
    %282 = vmatpush1.bf16.msra.mxu0 0
    %283 = vmatprep.subr.bf16.mxu0 0
    %284 = vmatpush1.bf16.msra.mxu0 0
    %285 = vmatprep.subr.bf16.mxu0 0
    %286 = vmatpush1.bf16.msra.mxu0 0
    %287 = vmatprep.subr.bf16.mxu0 0
    %288 = vmatpush1.bf16.msra.mxu0 0
    %289 = vmatprep.mubr.f32.mxu0 0.0
    %290 = vmatmul.mubr.f32.gmra.mrb[0].mxu0 %v255
    %v291 = vpop.f32.mrb[0].mxu0
    %v292 = vadd.f32 %v233, %v291
    %v293 = vpop.f32.mrb[0].mxu0
    %294 = vdwg.mxu0
    %v295 = vmax.f32 %v292, 0.0
    %v296 = vld [vmem:[%s7] sm:$0xf]
    %v297 = vld [vmem:[%s7 + $0x4] sm:$0xf]
    %v298 = vld [vmem:[%s7 + $0x8] sm:$0xf]
    %v299 = vld [vmem:[%s8] sm:$0x1]
    %v301 = vlaneseq
    %v302 = vshrl.u32 %v301, 7
    %v303 = vsub.s32 0, %v302
    %v304 = vrot.slane %v299, %v303
    %v309 = vunpack.c.l.b16 %v296
    %v310 = vunpack.c.l.b16 %v297
    %v311 = vunpack.c.l.b16 %v298
    %v312 = vpack.c.b16 %v310, %v309
    %v313 = vpack.c.b16 %v311, %v311
    %vm315 = vcmask 195584
    %v317 = vsel %vm315, %v295, 0
    %vm319 = vcmask 1043456
    %v321 = vsel %vm319, %v313, 0
    %323 = vmatprep.subr.bf16.mxu0 0
    %324 = vmatpush1.bf16.msra.mxu0 %v312
    %325 = vmatprep.subr.bf16.mxu0 0
    %326 = vmatpush1.bf16.msra.mxu0 %v321
    %327 = vmatprep.subr.bf16.mxu0 0
    %328 = vmatpush1.bf16.msra.mxu0 0
    %329 = vmatprep.subr.bf16.mxu0 0
    %330 = vmatpush1.bf16.msra.mxu0 0
    %331 = vmatprep.subr.bf16.mxu0 0
    %332 = vmatpush1.bf16.msra.mxu0 0
    %333 = vmatprep.subr.bf16.mxu0 0
    %334 = vmatpush1.bf16.msra.mxu0 0
    %335 = vmatprep.subr.bf16.mxu0 0
    %336 = vmatpush1.bf16.msra.mxu0 0
    %337 = vmatprep.subr.bf16.mxu0 0
    %338 = vmatpush1.bf16.msra.mxu0 0
    %339 = vmatprep.subr.bf16.mxu0 0
    %340 = vmatpush1.bf16.msra.mxu0 0
    %341 = vmatprep.subr.bf16.mxu0 0
    %342 = vmatpush1.bf16.msra.mxu0 0
    %343 = vmatprep.subr.bf16.mxu0 0
    %344 = vmatpush1.bf16.msra.mxu0 0
    %345 = vmatprep.subr.bf16.mxu0 0
    %346 = vmatpush1.bf16.msra.mxu0 0
    %347 = vmatprep.subr.bf16.mxu0 0
    %348 = vmatpush1.bf16.msra.mxu0 0
    %349 = vmatprep.subr.bf16.mxu0 0
    %350 = vmatpush1.bf16.msra.mxu0 0
    %351 = vmatprep.subr.bf16.mxu0 0
    %352 = vmatpush1.bf16.msra.mxu0 0
    %353 = vmatprep.subr.bf16.mxu0 0
    %354 = vmatpush1.bf16.msra.mxu0 0
    %355 = vmatprep.mubr.f32.mxu0 0.0
    %356 = vmatmul.mubr.f32.gmra.mrb[0].mxu0 %v317
    %v357 = vpop.f32.mrb[0].mxu0
    %v358 = vadd.f32 %v304, %v357
    %v359 = vpop.f32.mrb[0].mxu0
    %360 = vdwg.mxu0
    %v361 = vmax.f32 %v358, 0.0
    %v362 = vld [vmem:[%s9] sm:$0xf]
    %v363 = vld [vmem:[%s9 + $0x4] sm:$0xf]
    %v364 = vld [vmem:[%s10] sm:$0x1]
    %v366 = vlaneseq
    %v367 = vshrl.u32 %v366, 7
    %v368 = vsub.s32 0, %v367
    %v369 = vrot.slane %v364, %v368
    %v373 = vunpack.c.l.b16 %v362
    %v374 = vunpack.c.l.b16 %v363
    %v375 = vpack.c.b16 %v374, %v373
    %vm377 = vcmask 130048
    %v379 = vsel %vm377, %v361, 0
    %381 = vmatprep.subr.bf16.mxu0 0
    %382 = vmatpush1.bf16.msra.mxu0 %v375
    %383 = vmatprep.subr.bf16.mxu0 0
    %384 = vmatpush1.bf16.msra.mxu0 0
    %385 = vmatprep.subr.bf16.mxu0 0
    %386 = vmatpush1.bf16.msra.mxu0 0
    %387 = vmatprep.subr.bf16.mxu0 0
    %388 = vmatpush1.bf16.msra.mxu0 0
    %389 = vmatprep.subr.bf16.mxu0 0
    %390 = vmatpush1.bf16.msra.mxu0 0
    %391 = vmatprep.subr.bf16.mxu0 0
    %392 = vmatpush1.bf16.msra.mxu0 0
    %393 = vmatprep.subr.bf16.mxu0 0
    %394 = vmatpush1.bf16.msra.mxu0 0
    %395 = vmatprep.subr.bf16.mxu0 0
    %396 = vmatpush1.bf16.msra.mxu0 0
    %397 = vmatprep.subr.bf16.mxu0 0
    %398 = vmatpush1.bf16.msra.mxu0 0
    %399 = vmatprep.subr.bf16.mxu0 0
    %400 = vmatpush1.bf16.msra.mxu0 0
    %401 = vmatprep.subr.bf16.mxu0 0
    %402 = vmatpush1.bf16.msra.mxu0 0
    %403 = vmatprep.subr.bf16.mxu0 0
    %404 = vmatpush1.bf16.msra.mxu0 0
    %405 = vmatprep.subr.bf16.mxu0 0
    %406 = vmatpush1.bf16.msra.mxu0 0
    %407 = vmatprep.subr.bf16.mxu0 0
    %408 = vmatpush1.bf16.msra.mxu0 0
    %409 = vmatprep.subr.bf16.mxu0 0
    %410 = vmatpush1.bf16.msra.mxu0 0
    %411 = vmatprep.subr.bf16.mxu0 0
    %412 = vmatpush1.bf16.msra.mxu0 0
    %413 = vmatprep.mubr.f32.mxu0 0.0
    %414 = vmatmul.mubr.f32.gmra.mrb[0].mxu0 %v379
    %v415 = vpop.f32.mrb[0].mxu0
    %v416 = vadd.f32 %v369, %v415
    %v417 = vpop.f32.mrb[0].mxu0
    %418 = vdwg.mxu0
    %vm419 = vcmask 64512
    %420 = vst.msk [vmem:[#allocation2] sm:$0xff] %vm419, %v416
    // Predicated region
    $region46: #{tpu_custom_call.1} parent=1 // pred_check
      _
    $region47: #{tpu_custom_call.1} parent=1 // pred_check_branch
      %422 = sbr.rel (0) target = $region49
    $region48: #{tpu_custom_call.1} parent=1 // pred_region
      %s424 = ssub.s32 128, 32
      %425 = vsyncadd [#allocation3], %s424
      %s426 = sshll.u32 [#allocation2], 4
      %s427 = int_to_ptr.vmem [resolvable:$true] %s426
      %432 = dma.vmem_to_hbm [thread:$0]  %s427, 32, %s11, [#allocation3], 32, 32, 2
    $region49: #{tpu_custom_call.1} parent=1 // pred_fallthru
      _
    // Predicated region
    $region50: #{tpu_custom_call.1} parent=1 // pred_check
      _
    $region51: #{tpu_custom_call.1} parent=1 // pred_check_branch
      %434 = sbr.rel (0) target = $region53
    $region52: #{tpu_custom_call.1} parent=1 // pred_region
      %435 = dma.done [#allocation3], 128
    $region53: #{tpu_custom_call.1} parent=1 // pred_fallthru
      _
    %436 = vsyncpa [#allocation3], 1

</llo_original>
